<compile_context>
chip_gen: v7x
topology: tpu7x:2x2x1
jax: 0.10.0
libtpu: 0.0.40
codegen_flags: <defaults>
</compile_context>

<pallas_src>
import functools

import jax
import jax.numpy as jnp
import numpy as np
from jax.experimental import pallas as pl
from jax.experimental.pallas import tpu as pltpu


_VMEM_LIMIT = 48 * 1024 * 1024  # headroom under v7x's 64 MiB physical VMEM


def _cparams(*sem):
    return pltpu.CompilerParams(dimension_semantics=tuple(sem),
                                vmem_limit_bytes=_VMEM_LIMIT)


# ---------------------------------------------------------------------------
# Kernels
# ---------------------------------------------------------------------------

def _conv1x1_bn_relu_kernel(x_ref, w_ref, b_ref, o_ref):
    """1x1 conv (matmul, BN scale pre-folded into w) + bias + ReLU."""
    y = jnp.dot(x_ref[...], w_ref[...], preferred_element_type=jnp.float32)
    y = y + b_ref[...]
    o_ref[...] = jnp.maximum(y, 0.0).astype(o_ref.dtype)


def _conv3_down_fused_kernel(a_ref, r_ref, w3_ref, wd_ref, b_ref, o_ref):
    """Fused conv3(1x1)+BN3 + downsample(1x1)+BNd + residual add + ReLU.

    a_ref: (tile_m, planes)   out2 rows
    r_ref: (tile_m, inplanes) subsampled-x rows (residual path)
    b_ref: (1, 2*planes)      b3 + bd (both BN biases summed)
    """
    y = jnp.dot(a_ref[...], w3_ref[...], preferred_element_type=jnp.float32)
    y = y + jnp.dot(r_ref[...], wd_ref[...], preferred_element_type=jnp.float32)
    y = y + b_ref[...]
    o_ref[...] = jnp.maximum(y, 0.0).astype(o_ref.dtype)


def _conv3x3_bn_relu_kernel(xm_ref, xh1_ref, xh2_ref, w_ref, b_ref, o_ref,
                            acc_ref, *, stride, TH, Wo):
    """3x3 conv (9 shifted-tap MXU matmuls) + bias + ReLU on one row tile.

    xm_ref:  (1, TH*stride, Wp, Cin)  main rows of the zero-padded input
    xh1/2:   (1, 1, Wp, Cin)          two bottom-halo rows
    w_ref:   (3, 3, Cin, Cout)        BN scale pre-folded
    acc_ref: (TH*Wo, Cout) f32 VMEM scratch accumulator
    o_ref:   (1, TH, Wo, Cout)
    """
    cin = xm_ref.shape[-1]
    cout = w_ref.shape[-1]
    th_main = TH * stride

    # Assemble the (TH*stride + 2)-row halo window (main slab + 2 halo rows).
    xb = jnp.concatenate([xm_ref[0], xh1_ref[0], xh2_ref[0]], axis=0)

    h_hi = (TH - 1) * stride + 1
    w_hi = (Wo - 1) * stride + 1
    t = 0
    for dy in range(3):
        for dx in range(3):
            if stride == 1:
                tap = xb[dy:dy + TH, dx:dx + Wo, :]
            else:
                tap = xb[dy:dy + h_hi:stride, dx:dx + w_hi:stride, :]
            contrib = jnp.dot(tap.reshape(TH * Wo, cin), w_ref[dy, dx],
                              preferred_element_type=jnp.float32)
            if t == 0:
                acc_ref[...] = contrib
            else:
                acc_ref[...] += contrib
            t += 1

    y = jnp.maximum(acc_ref[...] + b_ref[...], 0.0)
    o_ref[...] = y.reshape(1, TH, Wo, cout).astype(o_ref.dtype)


# ---------------------------------------------------------------------------
# Pallas wrappers
# ---------------------------------------------------------------------------

def conv1x1_bn_relu(x2d, w_scaled, bias, *, tile_m=512):
    """x2d: (M, Cin) -> relu(x2d @ w_scaled + bias), shape (M, Cout)."""
    M, Cin = x2d.shape
    Cout = w_scaled.shape[1]
    tm = min(tile_m, M)
    grid = (pl.cdiv(M, tm),)
    return pl.pallas_call(
        _conv1x1_bn_relu_kernel,
        grid=grid,
        in_specs=[
            pl.BlockSpec((tm, Cin), lambda i: (i, 0)),
            pl.BlockSpec((Cin, Cout), lambda i: (0, 0)),
            pl.BlockSpec((1, Cout), lambda i: (0, 0)),
        ],
        out_specs=pl.BlockSpec((tm, Cout), lambda i: (i, 0)),
        out_shape=jax.ShapeDtypeStruct((M, Cout), jnp.float32),
        compiler_params=_cparams("parallel"),
    )(x2d, w_scaled, bias.reshape(1, -1))


def conv3_downsample_fused(a2d, r2d, w3s, wds, bias, *, tile_m=512):
    """relu(a2d @ w3s + r2d @ wds + bias): conv3 + downsample + add + ReLU."""
    M, K1 = a2d.shape
    _, K2 = r2d.shape
    Cout = w3s.shape[1]
    tm = min(tile_m, M)
    grid = (pl.cdiv(M, tm),)
    return pl.pallas_call(
        _conv3_down_fused_kernel,
        grid=grid,
        in_specs=[
            pl.BlockSpec((tm, K1), lambda i: (i, 0)),
            pl.BlockSpec((tm, K2), lambda i: (i, 0)),
            pl.BlockSpec((K1, Cout), lambda i: (0, 0)),
            pl.BlockSpec((K2, Cout), lambda i: (0, 0)),
            pl.BlockSpec((1, Cout), lambda i: (0, 0)),
        ],
        out_specs=pl.BlockSpec((tm, Cout), lambda i: (i, 0)),
        out_shape=jax.ShapeDtypeStruct((M, Cout), jnp.float32),
        compiler_params=_cparams("parallel"),
    )(a2d, r2d, w3s, wds, bias.reshape(1, -1))


def _pick_row_tile(Ho, stride, Wp, Cin, budget_bytes=2 << 20):
    """Largest divisor of Ho whose input slab fits the budget; prefer >=2 tiles."""
    row_bytes = stride * Wp * Cin * 4
    best = 1
    for th in range(Ho, 0, -1):
        if Ho % th == 0 and th * row_bytes <= budget_bytes:
            best = th
            break
    if best == Ho and Ho % 2 == 0 and Ho > 1:
        best = Ho // 2  # expose >=2 row tiles (megacore / v7x dual-TC)
    return best


def conv3x3_bn_relu(x_nhwc, w_scaled, bias, stride):
    """x_nhwc: (N, H, W, Cin) -> (N, Ho, Wo, Cout); 3x3 conv, pad=1, stride."""
    N, H, W, Cin = x_nhwc.shape
    Cout = w_scaled.shape[-1]
    Ho = (H + 2 - 3) // stride + 1
    Wo = (W + 2 - 3) // stride + 1
    Wp = W + 2

    TH = _pick_row_tile(Ho, stride, Wp, Cin)
    n_tiles = Ho // TH
    TH_main = TH * stride

    # Zero-pad (W by 1 on each side; H by 1 on top and enough on the bottom
    # so the two 1-row halo blocks of the last tile stay in bounds).
    rows_needed = n_tiles * TH_main + 2
    pad_bottom = 1 + max(0, rows_needed - (H + 2))
    xpad = jnp.pad(x_nhwc, ((0, 0), (1, pad_bottom), (1, 1), (0, 0)))

    kernel = functools.partial(_conv3x3_bn_relu_kernel,
                               stride=stride, TH=TH, Wo=Wo)

    main_spec = pl.BlockSpec((1, TH_main, Wp, Cin), lambda n, j: (n, j, 0, 0))
    halo1_spec = pl.BlockSpec((1, 1, Wp, Cin),
                              lambda n, j: (n, (j + 1) * TH_main, 0, 0))
    halo2_spec = pl.BlockSpec((1, 1, Wp, Cin),
                              lambda n, j: (n, (j + 1) * TH_main + 1, 0, 0))

    return pl.pallas_call(
        kernel,
        grid=(N, n_tiles),
        in_specs=[
            main_spec, halo1_spec, halo2_spec,
            pl.BlockSpec((3, 3, Cin, Cout), lambda n, j: (0, 0, 0, 0)),
            pl.BlockSpec((1, Cout), lambda n, j: (0, 0)),
        ],
        out_specs=pl.BlockSpec((1, TH, Wo, Cout), lambda n, j: (n, j, 0, 0)),
        out_shape=jax.ShapeDtypeStruct((N, Ho, Wo, Cout), jnp.float32),
        scratch_shapes=[pltpu.VMEM((TH * Wo, Cout), jnp.float32)],
        compiler_params=_cparams("parallel", "parallel"),
    )(xpad, xpad, xpad, w_scaled, bias.reshape(1, -1))


# ---------------------------------------------------------------------------
# Bottleneck forward (glue in plain JAX, hot path in Pallas)
# ---------------------------------------------------------------------------

def bottleneck_forward(x_nchw, p, stride=1):
    x = jnp.transpose(x_nchw, (0, 2, 3, 1)).astype(jnp.float32)   # NHWC
    N, H, W, Cin = x.shape
    planes = p["w1"].shape[1]
    cout = 2 * planes

    # Fold eval-mode BN scales into the conv weights; kernels add bias only.
    w1s = p["w1"] * p["s1"][None, :]
    w2s = p["w2"] * p["s2"][None, None, None, :]
    w3s = p["w3"] * p["s3"][None, :]
    wds = p["wd"] * p["sd"][None, :]
    b3d = p["b3"] + p["bd"]     # conv3-BN bias + downsample-BN bias, fused

    # conv1 (1x1) + bn1 + relu
    out1 = conv1x1_bn_relu(x.reshape(N * H * W, Cin), w1s, p["b1"])
    out1 = out1.reshape(N, H, W, planes)

    # conv2 (3x3, stride, pad=1) + bn2 + relu  (row-tiled, halo via BlockSpec)
    out2 = conv3x3_bn_relu(out1, w2s, p["b2"], stride)
    _, Ho, Wo, _ = out2.shape

    # residual path input (spatial subsample only needed when stride > 1)
    if stride == 1:
        x_s = x
    else:
        # TODO(synk): express the strided subsample via the fused kernel's
        # BlockSpec instead of materialising it in HBM.
        x_s = x[:, ::stride, ::stride, :]

    # conv3 (1x1) + bn3 + downsample (1x1 + bn) + residual add + relu, fused
    out3 = conv3_downsample_fused(out2.reshape(N * Ho * Wo, planes),
                                  x_s.reshape(N * Ho * Wo, Cin),
                                  w3s, wds, b3d)

    out = out3.reshape(N, Ho, Wo, cout)
    return jnp.transpose(out, (0, 3, 1, 2))                        # back to NCHW


# ---------------------------------------------------------------------------
# Deterministic parameter init (mirrors nn.Conv2d / nn.BatchNorm2d shapes)
# ---------------------------------------------------------------------------

def init_params(key, inplanes, planes):
    ks = jax.random.split(key, 20)
    it = iter(ks)

    def conv_w(shape, fan_in):
        return (jax.random.normal(next(it), shape, jnp.float32)
                * np.sqrt(2.0 / fan_in)).astype(jnp.float32)

    def bn(c):
        gamma = jax.random.uniform(next(it), (c,), jnp.float32, 0.5, 1.5)
        beta = jax.random.normal(next(it), (c,), jnp.float32) * 0.1
        mean = jax.random.normal(next(it), (c,), jnp.float32) * 0.1
        var = jax.random.uniform(next(it), (c,), jnp.float32, 0.5, 1.5)
        scale = gamma / jnp.sqrt(var + 1e-5)
        bias = beta - mean * scale
        return scale, bias

    p = {}
    p["w1"] = conv_w((inplanes, planes), inplanes)            # 1x1, (Cin, Cout)
    p["s1"], p["b1"] = bn(planes)
    p["w2"] = conv_w((3, 3, planes, planes), 9 * planes)      # 3x3, HWIO
    p["s2"], p["b2"] = bn(planes)
    p["w3"] = conv_w((planes, 2 * planes), planes)            # 1x1
    p["s3"], p["b3"] = bn(2 * planes)
    p["wd"] = conv_w((inplanes, 2 * planes), inplanes)        # downsample 1x1
    p["sd"], p["bd"] = bn(2 * planes)
    return p


# ---------------------------------------------------------------------------
# Pure-JAX reference (for correctness check)
# ---------------------------------------------------------------------------

def reference_forward(x_nchw, p, stride=1):
    x = jnp.transpose(x_nchw, (0, 2, 3, 1)).astype(jnp.float32)

    def conv(inp, w, strides, padding):
        return jax.lax.conv_general_dilated(
            inp, w, window_strides=strides, padding=padding,
            dimension_numbers=("NHWC", "HWIO", "NHWC"),
            precision=jax.lax.Precision.HIGHEST)

    o = conv(x, p["w1"][None, None], (1, 1), "VALID")
    o = jnp.maximum(o * p["s1"] + p["b1"], 0.0)
    o = conv(o, p["w2"], (stride, stride), ((1, 1), (1, 1)))
    o = jnp.maximum(o * p["s2"] + p["b2"], 0.0)
    o = conv(o, p["w3"][None, None], (1, 1), "VALID")
    o = o * p["s3"] + p["b3"]
    r = conv(x, p["wd"][None, None], (stride, stride), "VALID")
    r = r * p["sd"] + p["bd"]
    o = jnp.maximum(o + r, 0.0)
    return jnp.transpose(o, (0, 3, 1, 2))


# ---------------------------------------------------------------------------

if __name__ == "__main__":
    N, inplanes, planes, H, W, stride = 2, 64, 32, 16, 16, 1

    key = jax.random.PRNGKey(0)
    kx, kp = jax.random.split(key)
    x = jax.random.normal(kx, (N, inplanes, H, W), jnp.float32)   # NCHW input
    params = init_params(kp, inplanes, planes)

    out = bottleneck_forward(x, params, stride=stride)
    out = jax.block_until_ready(out)

    ref = jax.block_until_ready(reference_forward(x, params, stride=stride))
    assert out.shape == (N, 2 * planes, H, W), out.shape
    np.testing.assert_allclose(np.asarray(out), np.asarray(ref),
                               rtol=1e-3, atol=1e-3)

    print("KERNEL_OK")
</pallas_src>

<mosaic_0001>
module attributes {stable_mosaic.version = 11 : i64} {
  func.func @_conv1x1_bn_relu_kernel(%arg0: i32, %arg1: memref<512x64xf32, #tpu.memory_space<vmem>>, %arg2: memref<64x32xf32, #tpu.memory_space<vmem>>, %arg3: memref<1x32xf32, #tpu.memory_space<vmem>>, %arg4: memref<512x32xf32, #tpu.memory_space<vmem>>) attributes {dimension_semantics = [#tpu.dimension_semantics<parallel>], iteration_bounds = array<i64: 1>, scalar_prefetch = 0 : i64, scratch_operands = 0 : i64, tpu.core_type = #tpu.core_type<tc>, window_params = [{transform_indices = @transform_0, window_bounds = array<i64: 512, 64>}, {pipeline_mode = #tpu.pipeline_mode<synchronous>, transform_indices = @transform_1, window_bounds = array<i64: 64, 32>}, {pipeline_mode = #tpu.pipeline_mode<synchronous>, transform_indices = @transform_2, window_bounds = array<i64: 1, 32>}, {transform_indices = @transform_3, window_bounds = array<i64: 512, 32>}]} {
    %c0 = arith.constant 0 : index
    %c0_0 = arith.constant 0 : index
    %0 = vector.load %arg1[%c0, %c0_0] : memref<512x64xf32, #tpu.memory_space<vmem>>, vector<512x64xf32>
    %c0_1 = arith.constant 0 : index
    %c0_2 = arith.constant 0 : index
    %1 = vector.load %arg2[%c0_1, %c0_2] : memref<64x32xf32, #tpu.memory_space<vmem>>, vector<64x32xf32>
    %cst = arith.constant dense<0.000000e+00> : vector<512x32xf32>
    %2 = tpu.matmul %0, %1, %cst {dimension_numbers = #tpu.dot_dimension_numbers<[1], [0], [0], [1], [0, 0, 1, 1], [], []>} : vector<512x64xf32>, vector<64x32xf32>, vector<512x32xf32> -> vector<512x32xf32>
    %c0_3 = arith.constant 0 : index
    %c0_4 = arith.constant 0 : index
    %3 = vector.load %arg3[%c0_3, %c0_4] : memref<1x32xf32, #tpu.memory_space<vmem>>, vector<1x32xf32>
    %4 = vector.broadcast %3 : vector<1x32xf32> to vector<512x32xf32>
    %5 = arith.addf %2, %4 : vector<512x32xf32>
    %cst_5 = arith.constant 0.000000e+00 : f32
    %6 = vector.broadcast %cst_5 : f32 to vector<512x32xf32>
    %7 = arith.maximumf %5, %6 : vector<512x32xf32>
    %c0_6 = arith.constant 0 : index
    %c0_7 = arith.constant 0 : index
    %8 = vector.load %arg4[%c0_6, %c0_7] : memref<512x32xf32, #tpu.memory_space<vmem>>, vector<512x32xf32>
    tpu.vector_store %arg4[%c0_6, %c0_7], %7 {strides = array<i32>} : memref<512x32xf32, #tpu.memory_space<vmem>>, vector<512x32xf32>,
    return
  }
  func.func @transform_0(%arg0: i32) -> (i32, i32) {
    %c0_i32 = arith.constant 0 : i32
    %c0_i32_0 = arith.constant 0 : i32
    return %arg0, %c0_i32 : i32, i32
  }
  func.func @transform_1(%arg0: i32) -> (i32, i32) {
    %c0_i32 = arith.constant 0 : i32
    %c0_i32_0 = arith.constant 0 : i32
    %c0_i32_1 = arith.constant 0 : i32
    return %c0_i32, %c0_i32_0 : i32, i32
  }
  func.func @transform_2(%arg0: i32) -> (i32, i32) {
    %c0_i32 = arith.constant 0 : i32
    %c0_i32_0 = arith.constant 0 : i32
    %c0_i32_1 = arith.constant 0 : i32
    return %c0_i32, %c0_i32_0 : i32, i32
  }
  func.func @transform_3(%arg0: i32) -> (i32, i32) {
    %c0_i32 = arith.constant 0 : i32
    %c0_i32_0 = arith.constant 0 : i32
    return %arg0, %c0_i32 : i32, i32
  }
}

</mosaic_0001>

<llo_original>
// kernel: tpu_custom_call.1
$region0: #{tpu_custom_call.1}
  #allocation0 [shape = 'u32[]', space=smem, size = 0x4, offset = 0x4, fixed_abs, tag = 'smem constant byte address 0x4 - core index']
  #allocation1 [shape = 'u32[144,128]{1,0:T(1,128)}', space=vmem, size = 0x12000, scoped, tag = 'internal scratch']
  %s0 = inlined_call_operand.vmem [shape: f32[512,64], index: 0, kind: input, shape index: {}]
  %s1 = inlined_call_operand.vmem [shape: f32[64,32], index: 1, kind: input, shape index: {}]
  %s2 = inlined_call_operand.vmem [shape: f32[1,32], index: 2, kind: input, shape index: {}]
  %s3 = inlined_call_operand.vmem [shape: f32[512,32], index: 3, kind: output, shape index: {}]
  %s4 = sld [smem:[#allocation0]]
  $region22: #{tpu_custom_call.1} parent=0
    _
  %s6 = ssub.s32 1, %s4
  %s7 = scalar_select 0, %s6, %s4
  // Predicated region
  $region2: #{tpu_custom_call.1} parent=0 // pred_check
    _
  $region3: #{tpu_custom_call.1} parent=0 // pred_check_branch
    %9 = sbr.rel (0) target = $region5
  $region4: #{tpu_custom_call.1} parent=0 // pred_region
    _
  $region5: #{tpu_custom_call.1} parent=0 // pred_fallthru
    _
  // Predicated region
  $region6: #{tpu_custom_call.1} parent=0 // pred_check
    _
  $region7: #{tpu_custom_call.1} parent=0 // pred_check_branch
    %11 = sbr.rel (0) target = $region9
  $region8: #{tpu_custom_call.1} parent=0 // pred_region
    _
  $region9: #{tpu_custom_call.1} parent=0 // pred_fallthru
    _
  // Predicated region
  $region10: #{tpu_custom_call.1} parent=0 // pred_check
    _
  $region11: #{tpu_custom_call.1} parent=0 // pred_check_branch
    %13 = sbr.rel (0) target = $region13
  $region12: #{tpu_custom_call.1} parent=0 // pred_region
    _
  $region13: #{tpu_custom_call.1} parent=0 // pred_fallthru
    _
  %v14 = vld [vmem:[%s0] sm:$0xff]
  %v15 = vld [vmem:[%s0 + $0x8] sm:$0xff]
  %v16 = vld [vmem:[%s0 + $0x10] sm:$0xff]
  %v17 = vld [vmem:[%s0 + $0x18] sm:$0xff]
  %v18 = vld [vmem:[%s0 + $0x20] sm:$0xff]
  %v19 = vld [vmem:[%s0 + $0x28] sm:$0xff]
  %v20 = vld [vmem:[%s0 + $0x30] sm:$0xff]
  %v21 = vld [vmem:[%s0 + $0x38] sm:$0xff]
  %v22 = vld [vmem:[%s0 + $0x40] sm:$0xff]
  %v23 = vld [vmem:[%s0 + $0x48] sm:$0xff]
  %v24 = vld [vmem:[%s0 + $0x50] sm:$0xff]
  %v25 = vld [vmem:[%s0 + $0x58] sm:$0xff]
  %v26 = vld [vmem:[%s0 + $0x60] sm:$0xff]
  %v27 = vld [vmem:[%s0 + $0x68] sm:$0xff]
  %v28 = vld [vmem:[%s0 + $0x70] sm:$0xff]
  %v29 = vld [vmem:[%s0 + $0x78] sm:$0xff]
  %v30 = vld [vmem:[%s0 + $0x80] sm:$0xff]
  %v31 = vld [vmem:[%s0 + $0x88] sm:$0xff]
  %v32 = vld [vmem:[%s0 + $0x90] sm:$0xff]
  %v33 = vld [vmem:[%s0 + $0x98] sm:$0xff]
  %v34 = vld [vmem:[%s0 + $0xa0] sm:$0xff]
  %v35 = vld [vmem:[%s0 + $0xa8] sm:$0xff]
  %v36 = vld [vmem:[%s0 + $0xb0] sm:$0xff]
  %v37 = vld [vmem:[%s0 + $0xb8] sm:$0xff]
  %v38 = vld [vmem:[%s0 + $0xc0] sm:$0xff]
  %v39 = vld [vmem:[%s0 + $0xc8] sm:$0xff]
  %v40 = vld [vmem:[%s0 + $0xd0] sm:$0xff]
  %v41 = vld [vmem:[%s0 + $0xd8] sm:$0xff]
  %v42 = vld [vmem:[%s0 + $0xe0] sm:$0xff]
  %v43 = vld [vmem:[%s0 + $0xe8] sm:$0xff]
  %v44 = vld [vmem:[%s0 + $0xf0] sm:$0xff]
  %v45 = vld [vmem:[%s0 + $0xf8] sm:$0xff]
  %v46 = vld [vmem:[%s0 + $0x100] sm:$0xff]
  %v47 = vld [vmem:[%s0 + $0x108] sm:$0xff]
  %v48 = vld [vmem:[%s0 + $0x110] sm:$0xff]
  %v49 = vld [vmem:[%s0 + $0x118] sm:$0xff]
  %v50 = vld [vmem:[%s0 + $0x120] sm:$0xff]
  %v51 = vld [vmem:[%s0 + $0x128] sm:$0xff]
  %v52 = vld [vmem:[%s0 + $0x130] sm:$0xff]
  %v53 = vld [vmem:[%s0 + $0x138] sm:$0xff]
  %v54 = vld [vmem:[%s0 + $0x140] sm:$0xff]
  %v55 = vld [vmem:[%s0 + $0x148] sm:$0xff]
  %v56 = vld [vmem:[%s0 + $0x150] sm:$0xff]
  %v57 = vld [vmem:[%s0 + $0x158] sm:$0xff]
  %v58 = vld [vmem:[%s0 + $0x160] sm:$0xff]
  %v59 = vld [vmem:[%s0 + $0x168] sm:$0xff]
  %v60 = vld [vmem:[%s0 + $0x170] sm:$0xff]
  %v61 = vld [vmem:[%s0 + $0x178] sm:$0xff]
  %v62 = vld [vmem:[%s0 + $0x180] sm:$0xff]
  %v63 = vld [vmem:[%s0 + $0x188] sm:$0xff]
  %v64 = vld [vmem:[%s0 + $0x190] sm:$0xff]
  %v65 = vld [vmem:[%s0 + $0x198] sm:$0xff]
  %v66 = vld [vmem:[%s0 + $0x1a0] sm:$0xff]
  %v67 = vld [vmem:[%s0 + $0x1a8] sm:$0xff]
  %v68 = vld [vmem:[%s0 + $0x1b0] sm:$0xff]
  %v69 = vld [vmem:[%s0 + $0x1b8] sm:$0xff]
  %v70 = vld [vmem:[%s0 + $0x1c0] sm:$0xff]
  %v71 = vld [vmem:[%s0 + $0x1c8] sm:$0xff]
  %v72 = vld [vmem:[%s0 + $0x1d0] sm:$0xff]
  %v73 = vld [vmem:[%s0 + $0x1d8] sm:$0xff]
  %v74 = vld [vmem:[%s0 + $0x1e0] sm:$0xff]
  %v75 = vld [vmem:[%s0 + $0x1e8] sm:$0xff]
  %v76 = vld [vmem:[%s0 + $0x1f0] sm:$0xff]
  %v77 = vld [vmem:[%s0 + $0x1f8] sm:$0xff]
  %v78 = vld [vmem:[%s1] sm:$0xff]
  %v79 = vld [vmem:[%s1 + $0x8] sm:$0xff]
  %v80 = vld [vmem:[%s1 + $0x10] sm:$0xff]
  %v81 = vld [vmem:[%s1 + $0x18] sm:$0xff]
  %v82 = vld [vmem:[%s1 + $0x20] sm:$0xff]
  %v83 = vld [vmem:[%s1 + $0x28] sm:$0xff]
  %v84 = vld [vmem:[%s1 + $0x30] sm:$0xff]
  %v85 = vld [vmem:[%s1 + $0x38] sm:$0xff]
  %v86 = vld [vmem:[%s2] sm:$0x1]
  %v88 = vlaneseq
  %v89 = vshrl.u32 %v88, 7
  %v90 = vsub.s32 0, %v89
  %v91 = vrot.slane %v86, %v90
  %vm93 = vcmask 523264
  %v95 = vsel %vm93, %v14, 0
  %v98 = vsel %vm93, %v15, 0
  %v101 = vsel %vm93, %v16, 0
  %v104 = vsel %vm93, %v17, 0
  %v107 = vsel %vm93, %v18, 0
  %v110 = vsel %vm93, %v19, 0
  %v113 = vsel %vm93, %v20, 0
  %v116 = vsel %vm93, %v21, 0
  %v119 = vsel %vm93, %v22, 0
  %v122 = vsel %vm93, %v23, 0
  %v125 = vsel %vm93, %v24, 0
  %v128 = vsel %vm93, %v25, 0
  %v131 = vsel %vm93, %v26, 0
  %v134 = vsel %vm93, %v27, 0
  %v137 = vsel %vm93, %v28, 0
  %v140 = vsel %vm93, %v29, 0
  %v143 = vsel %vm93, %v30, 0
  %v146 = vsel %vm93, %v31, 0
  %v149 = vsel %vm93, %v32, 0
  %v152 = vsel %vm93, %v33, 0
  %v155 = vsel %vm93, %v34, 0
  %v158 = vsel %vm93, %v35, 0
  %v161 = vsel %vm93, %v36, 0
  %v164 = vsel %vm93, %v37, 0
  %v167 = vsel %vm93, %v38, 0
  %v170 = vsel %vm93, %v39, 0
  %v173 = vsel %vm93, %v40, 0
  %v176 = vsel %vm93, %v41, 0
  %v179 = vsel %vm93, %v42, 0
  %v182 = vsel %vm93, %v43, 0
  %v185 = vsel %vm93, %v44, 0
  %v188 = vsel %vm93, %v45, 0
  %v191 = vsel %vm93, %v46, 0
  %v194 = vsel %vm93, %v47, 0
  %v197 = vsel %vm93, %v48, 0
  %v200 = vsel %vm93, %v49, 0
  %v203 = vsel %vm93, %v50, 0
  %v206 = vsel %vm93, %v51, 0
  %v209 = vsel %vm93, %v52, 0
  %v212 = vsel %vm93, %v53, 0
  %v215 = vsel %vm93, %v54, 0
  %v218 = vsel %vm93, %v55, 0
  %v221 = vsel %vm93, %v56, 0
  %v224 = vsel %vm93, %v57, 0
  %v227 = vsel %vm93, %v58, 0
  %v230 = vsel %vm93, %v59, 0
  %v233 = vsel %vm93, %v60, 0
  %v236 = vsel %vm93, %v61, 0
  %v239 = vsel %vm93, %v62, 0
  %v242 = vsel %vm93, %v63, 0
  %v245 = vsel %vm93, %v64, 0
  %v248 = vsel %vm93, %v65, 0
  %v251 = vsel %vm93, %v66, 0
  %v254 = vsel %vm93, %v67, 0
  %v257 = vsel %vm93, %v68, 0
  %v260 = vsel %vm93, %v69, 0
  %v263 = vsel %vm93, %v70, 0
  %v266 = vsel %vm93, %v71, 0
  %v269 = vsel %vm93, %v72, 0
  %v272 = vsel %vm93, %v73, 0
  %v275 = vsel %vm93, %v74, 0
  %v278 = vsel %vm93, %v75, 0
  %v281 = vsel %vm93, %v76, 0
  %v284 = vsel %vm93, %v77, 0
  %286 = vmatprep.subr.mxu0 0.0
  %287 = vmatpush1.msra.mxu0 %v78
  %288 = vmatprep.subr.mxu0 0.0
  %289 = vmatpush1.msra.mxu0 %v79
  %290 = vmatprep.subr.mxu0 0.0
  %291 = vmatpush1.msra.mxu0 %v80
  %292 = vmatprep.subr.mxu0 0.0
  %293 = vmatpush1.msra.mxu0 %v81
  %294 = vmatprep.subr.mxu0 0.0
  %295 = vmatpush1.msra.mxu0 %v82
  %296 = vmatprep.subr.mxu0 0.0
  %297 = vmatpush1.msra.mxu0 %v83
  %298 = vmatprep.subr.mxu0 0.0
  %299 = vmatpush1.msra.mxu0 %v84
  %300 = vmatprep.subr.mxu0 0.0
  %301 = vmatpush1.msra.mxu0 %v85
  %302 = vmatprep.subr.mxu0 0.0
  %303 = vmatpush1.msra.mxu0 0.0
  %304 = vmatprep.subr.mxu0 0.0
  %305 = vmatpush1.msra.mxu0 0.0
  %306 = vmatprep.subr.mxu0 0.0
  %307 = vmatpush1.msra.mxu0 0.0
  %308 = vmatprep.subr.mxu0 0.0
  %309 = vmatpush1.msra.mxu0 0.0
  %310 = vmatprep.subr.mxu0 0.0
  %311 = vmatpush1.msra.mxu0 0.0
  %312 = vmatprep.subr.mxu0 0.0
  %313 = vmatpush1.msra.mxu0 0.0
  %314 = vmatprep.subr.mxu0 0.0
  %315 = vmatpush1.msra.mxu0 0.0
  %316 = vmatprep.subr.mxu0 0.0
  %317 = vmatpush1.msra.mxu0 0.0
  %318 = vmatprep.subr.mxu0 0.0
  %319 = vmatpush1.msra.mxu0 0.0
  %320 = vmatprep.subr.mxu0 0.0
  %321 = vmatpush1.msra.mxu0 0.0
  %322 = vmatprep.subr.mxu0 0.0
  %323 = vmatpush1.msra.mxu0 0.0
  %324 = vmatprep.subr.mxu0 0.0
  %325 = vmatpush1.msra.mxu0 0.0
  %326 = vmatprep.subr.mxu0 0.0
  %327 = vmatpush1.msra.mxu0 0.0
  %328 = vmatprep.subr.mxu0 0.0
  %329 = vmatpush1.msra.mxu0 0.0
  %330 = vmatprep.subr.mxu0 0.0
  %331 = vmatpush1.msra.mxu0 0.0
  %332 = vmatprep.subr.mxu0 0.0
  %333 = vmatpush1.msra.mxu0 0.0
  %334 = vmatprep.subr.mxu0 0.0
  %335 = vmatpush1.msra.mxu0 0.0
  %336 = vmatprep.subr.mxu0 0.0
  %337 = vmatpush1.msra.mxu0 0.0
  %338 = vmatprep.subr.mxu0 0.0
  %339 = vmatpush1.msra.mxu0 0.0
  %340 = vmatprep.subr.mxu0 0.0
  %341 = vmatpush1.msra.mxu0 0.0
  %342 = vmatprep.subr.mxu0 0.0
  %343 = vmatpush1.msra.mxu0 0.0
  %344 = vmatprep.subr.mxu0 0.0
  %345 = vmatpush1.msra.mxu0 0.0
  %346 = vmatprep.subr.mxu0 0.0
  %347 = vmatpush1.msra.mxu0 0.0
  %348 = vmatprep.subr.mxu0 0.0
  %349 = vmatpush1.msra.mxu0 0.0
  %350 = vmatprep.mubr.f32.mxu0 0.0
  %351 = vmatmul.mubr.f32.gmra.mrb[0].mxu0 %v95
  %v352 = vpop.f32.mrb[0].mxu0
  %v353 = vadd.f32 %v91, %v352
  %v354 = vpop.f32.mrb[0].mxu0
  %355 = vmatprep.mubr.f32.mxu0 0.0
  %356 = vmatmul.mubr.f32.gmra.mrb[0].mxu0 %v98
  %v357 = vpop.f32.mrb[0].mxu0
  %v358 = vadd.f32 %v91, %v357
  %v359 = vpop.f32.mrb[0].mxu0
  %360 = vmatprep.mubr.f32.mxu0 0.0
  %361 = vmatmul.mubr.f32.gmra.mrb[0].mxu0 %v101
  %v362 = vpop.f32.mrb[0].mxu0
  %v363 = vadd.f32 %v91, %v362
  %v364 = vpop.f32.mrb[0].mxu0
  %365 = vmatprep.mubr.f32.mxu0 0.0
  %366 = vmatmul.mubr.f32.gmra.mrb[0].mxu0 %v104
  %v367 = vpop.f32.mrb[0].mxu0
  %v368 = vadd.f32 %v91, %v367
  %v369 = vpop.f32.mrb[0].mxu0
  %370 = vmatprep.mubr.f32.mxu0 0.0
  %371 = vmatmul.mubr.f32.gmra.mrb[0].mxu0 %v107
  %v372 = vpop.f32.mrb[0].mxu0
  %v373 = vadd.f32 %v91, %v372
  %v374 = vpop.f32.mrb[0].mxu0
  %375 = vmatprep.mubr.f32.mxu0 0.0
  %376 = vmatmul.mubr.f32.gmra.mrb[0].mxu0 %v110
  %v377 = vpop.f32.mrb[0].mxu0
  %v378 = vadd.f32 %v91, %v377
  %v379 = vpop.f32.mrb[0].mxu0
  %380 = vmatprep.mubr.f32.mxu0 0.0
  %381 = vmatmul.mubr.f32.gmra.mrb[0].mxu0 %v113
  %v382 = vpop.f32.mrb[0].mxu0
  %v383 = vadd.f32 %v91, %v382
  %v384 = vpop.f32.mrb[0].mxu0
  %385 = vmatprep.mubr.f32.mxu0 0.0
  %386 = vmatmul.mubr.f32.gmra.mrb[0].mxu0 %v116
  %v387 = vpop.f32.mrb[0].mxu0
  %v388 = vadd.f32 %v91, %v387
  %v389 = vpop.f32.mrb[0].mxu0
  %390 = vmatprep.mubr.f32.mxu0 0.0
  %391 = vmatmul.mubr.f32.gmra.mrb[0].mxu0 %v119
  %v392 = vpop.f32.mrb[0].mxu0
  %v393 = vadd.f32 %v91, %v392
  %v394 = vpop.f32.mrb[0].mxu0
  %395 = vmatprep.mubr.f32.mxu0 0.0
  %396 = vmatmul.mubr.f32.gmra.mrb[0].mxu0 %v122
  %v397 = vpop.f32.mrb[0].mxu0
  %v398 = vadd.f32 %v91, %v397
  %v399 = vpop.f32.mrb[0].mxu0
  %400 = vmatprep.mubr.f32.mxu0 0.0
  %401 = vmatmul.mubr.f32.gmra.mrb[0].mxu0 %v125
  %v402 = vpop.f32.mrb[0].mxu0
  %v403 = vadd.f32 %v91, %v402
  %v404 = vpop.f32.mrb[0].mxu0
  %405 = vmatprep.mubr.f32.mxu0 0.0
  %406 = vmatmul.mubr.f32.gmra.mrb[0].mxu0 %v128
  %v407 = vpop.f32.mrb[0].mxu0
  %v408 = vadd.f32 %v91, %v407
  %v409 = vpop.f32.mrb[0].mxu0
  %410 = vmatprep.mubr.f32.mxu0 0.0
  %411 = vmatmul.mubr.f32.gmra.mrb[0].mxu0 %v131
  %v412 = vpop.f32.mrb[0].mxu0
  %v413 = vadd.f32 %v91, %v412
  %v414 = vpop.f32.mrb[0].mxu0
  %415 = vmatprep.mubr.f32.mxu0 0.0
  %416 = vmatmul.mubr.f32.gmra.mrb[0].mxu0 %v134
  %v417 = vpop.f32.mrb[0].mxu0
  %v418 = vadd.f32 %v91, %v417
  %v419 = vpop.f32.mrb[0].mxu0
  %420 = vmatprep.mubr.f32.mxu0 0.0
  %421 = vmatmul.mubr.f32.gmra.mrb[0].mxu0 %v137
  %v422 = vpop.f32.mrb[0].mxu0
  %v423 = vadd.f32 %v91, %v422
  %v424 = vpop.f32.mrb[0].mxu0
  %425 = vmatprep.mubr.f32.mxu0 0.0
  %426 = vmatmul.mubr.f32.gmra.mrb[0].mxu0 %v140
  %v427 = vpop.f32.mrb[0].mxu0
  %v428 = vadd.f32 %v91, %v427
  %v429 = vpop.f32.mrb[0].mxu0
  %430 = vmatprep.mubr.f32.mxu0 0.0
  %431 = vmatmul.mubr.f32.gmra.mrb[0].mxu0 %v143
  %v432 = vpop.f32.mrb[0].mxu0
  %v433 = vadd.f32 %v91, %v432
  %v434 = vpop.f32.mrb[0].mxu0
  %435 = vmatprep.mubr.f32.mxu0 0.0
  %436 = vmatmul.mubr.f32.gmra.mrb[0].mxu0 %v146
  %v437 = vpop.f32.mrb[0].mxu0
  %v438 = vadd.f32 %v91, %v437
  %v439 = vpop.f32.mrb[0].mxu0
  %440 = vmatprep.mubr.f32.mxu0 0.0
  %441 = vmatmul.mubr.f32.gmra.mrb[0].mxu0 %v149
  %v442 = vpop.f32.mrb[0].mxu0
  %v443 = vadd.f32 %v91, %v442
  %v444 = vpop.f32.mrb[0].mxu0
  %445 = vmatprep.mubr.f32.mxu0 0.0
  %446 = vmatmul.mubr.f32.gmra.mrb[0].mxu0 %v152
  %v447 = vpop.f32.mrb[0].mxu0
  %v448 = vadd.f32 %v91, %v447
  %v449 = vpop.f32.mrb[0].mxu0
  %450 = vmatprep.mubr.f32.mxu0 0.0
  %451 = vmatmul.mubr.f32.gmra.mrb[0].mxu0 %v155
  %v452 = vpop.f32.mrb[0].mxu0
  %v453 = vadd.f32 %v91, %v452
  %v454 = vpop.f32.mrb[0].mxu0
  %455 = vmatprep.mubr.f32.mxu0 0.0
  %456 = vmatmul.mubr.f32.gmra.mrb[0].mxu0 %v158
  %v457 = vpop.f32.mrb[0].mxu0
  %v458 = vadd.f32 %v91, %v457
  %v459 = vpop.f32.mrb[0].mxu0
  %460 = vmatprep.mubr.f32.mxu0 0.0
  %461 = vmatmul.mubr.f32.gmra.mrb[0].mxu0 %v161
  %v462 = vpop.f32.mrb[0].mxu0
  %v463 = vadd.f32 %v91, %v462
  %v464 = vpop.f32.mrb[0].mxu0
  %465 = vmatprep.mubr.f32.mxu0 0.0
  %466 = vmatmul.mubr.f32.gmra.mrb[0].mxu0 %v164
  %v467 = vpop.f32.mrb[0].mxu0
  %v468 = vadd.f32 %v91, %v467
  %v469 = vpop.f32.mrb[0].mxu0
  %470 = vmatprep.mubr.f32.mxu0 0.0
  %471 = vmatmul.mubr.f32.gmra.mrb[0].mxu0 %v167
  %v472 = vpop.f32.mrb[0].mxu0
  %v473 = vadd.f32 %v91, %v472
  %v474 = vpop.f32.mrb[0].mxu0
  %475 = vmatprep.mubr.f32.mxu0 0.0
  %476 = vmatmul.mubr.f32.gmra.mrb[0].mxu0 %v170
  %v477 = vpop.f32.mrb[0].mxu0
  %v478 = vadd.f32 %v91, %v477
  %v479 = vpop.f32.mrb[0].mxu0
  %480 = vmatprep.mubr.f32.mxu0 0.0
  %481 = vmatmul.mubr.f32.gmra.mrb[0].mxu0 %v173
  %v482 = vpop.f32.mrb[0].mxu0
  %v483 = vadd.f32 %v91, %v482
  %v484 = vpop.f32.mrb[0].mxu0
  %485 = vmatprep.mubr.f32.mxu0 0.0
  %486 = vmatmul.mubr.f32.gmra.mrb[0].mxu0 %v176
  %v487 = vpop.f32.mrb[0].mxu0
  %v488 = vadd.f32 %v91, %v487
  %v489 = vpop.f32.mrb[0].mxu0
  %490 = vmatprep.mubr.f32.mxu0 0.0
  %491 = vmatmul.mubr.f32.gmra.mrb[0].mxu0 %v179
  %v492 = vpop.f32.mrb[0].mxu0
  %v493 = vadd.f32 %v91, %v492
  %v494 = vpop.f32.mrb[0].mxu0
  %495 = vmatprep.mubr.f32.mxu0 0.0
  %496 = vmatmul.mubr.f32.gmra.mrb[0].mxu0 %v182
  %v497 = vpop.f32.mrb[0].mxu0
  %v498 = vadd.f32 %v91, %v497
  %v499 = vpop.f32.mrb[0].mxu0
  %500 = vmatprep.mubr.f32.mxu0 0.0
  %501 = vmatmul.mubr.f32.gmra.mrb[0].mxu0 %v185
  %v502 = vpop.f32.mrb[0].mxu0
  %v503 = vadd.f32 %v91, %v502
  %v504 = vpop.f32.mrb[0].mxu0
  %505 = vmatprep.mubr.f32.mxu0 0.0
  %506 = vmatmul.mubr.f32.gmra.mrb[0].mxu0 %v188
  %v507 = vpop.f32.mrb[0].mxu0
  %v508 = vadd.f32 %v91, %v507
  %v509 = vpop.f32.mrb[0].mxu0
  %510 = vmatprep.mubr.f32.mxu0 0.0
  %511 = vmatmul.mubr.f32.gmra.mrb[0].mxu0 %v191
  %v512 = vpop.f32.mrb[0].mxu0
  %v513 = vadd.f32 %v91, %v512
  %v514 = vpop.f32.mrb[0].mxu0
  %515 = vmatprep.mubr.f32.mxu0 0.0
  %516 = vmatmul.mubr.f32.gmra.mrb[0].mxu0 %v194
  %v517 = vpop.f32.mrb[0].mxu0
  %v518 = vadd.f32 %v91, %v517
  %v519 = vpop.f32.mrb[0].mxu0
  %520 = vmatprep.mubr.f32.mxu0 0.0
  %521 = vmatmul.mubr.f32.gmra.mrb[0].mxu0 %v197
  %v522 = vpop.f32.mrb[0].mxu0
  %v523 = vadd.f32 %v91, %v522
  %v524 = vpop.f32.mrb[0].mxu0
  %525 = vmatprep.mubr.f32.mxu0 0.0
  %526 = vmatmul.mubr.f32.gmra.mrb[0].mxu0 %v200
  %v527 = vpop.f32.mrb[0].mxu0
  %v528 = vadd.f32 %v91, %v527
  %v529 = vpop.f32.mrb[0].mxu0
  %530 = vmatprep.mubr.f32.mxu0 0.0
  %531 = vmatmul.mubr.f32.gmra.mrb[0].mxu0 %v203
  %v532 = vpop.f32.mrb[0].mxu0
  %v533 = vadd.f32 %v91, %v532
  %v534 = vpop.f32.mrb[0].mxu0
  %535 = vmatprep.mubr.f32.mxu0 0.0
  %536 = vmatmul.mubr.f32.gmra.mrb[0].mxu0 %v206
  %v537 = vpop.f32.mrb[0].mxu0
  %v538 = vadd.f32 %v91, %v537
  %v539 = vpop.f32.mrb[0].mxu0
  %540 = vmatprep.mubr.f32.mxu0 0.0
  %541 = vmatmul.mubr.f32.gmra.mrb[0].mxu0 %v209
  %v542 = vpop.f32.mrb[0].mxu0
  %v543 = vadd.f32 %v91, %v542
  %v544 = vpop.f32.mrb[0].mxu0
  %545 = vmatprep.mubr.f32.mxu0 0.0
  %546 = vmatmul.mubr.f32.gmra.mrb[0].mxu0 %v212
  %v547 = vpop.f32.mrb[0].mxu0
  %v548 = vadd.f32 %v91, %v547
  %v549 = vpop.f32.mrb[0].mxu0
  %550 = vmatprep.mubr.f32.mxu0 0.0
  %551 = vmatmul.mubr.f32.gmra.mrb[0].mxu0 %v215
  %v552 = vpop.f32.mrb[0].mxu0
  %v553 = vadd.f32 %v91, %v552
  %v554 = vpop.f32.mrb[0].mxu0
  %555 = vmatprep.mubr.f32.mxu0 0.0
  %556 = vmatmul.mubr.f32.gmra.mrb[0].mxu0 %v218
  %v557 = vpop.f32.mrb[0].mxu0
  %v558 = vadd.f32 %v91, %v557
  %v559 = vpop.f32.mrb[0].mxu0
  %560 = vmatprep.mubr.f32.mxu0 0.0
  %561 = vmatmul.mubr.f32.gmra.mrb[0].mxu0 %v221
  %v562 = vpop.f32.mrb[0].mxu0
  %v563 = vadd.f32 %v91, %v562
  %v564 = vpop.f32.mrb[0].mxu0
  %565 = vmatprep.mubr.f32.mxu0 0.0
  %566 = vmatmul.mubr.f32.gmra.mrb[0].mxu0 %v224
  %v567 = vpop.f32.mrb[0].mxu0
  %v568 = vadd.f32 %v91, %v567
  %v569 = vpop.f32.mrb[0].mxu0
  %570 = vmatprep.mubr.f32.mxu0 0.0
  %571 = vmatmul.mubr.f32.gmra.mrb[0].mxu0 %v227
  %v572 = vpop.f32.mrb[0].mxu0
  %v573 = vadd.f32 %v91, %v572
  %v574 = vpop.f32.mrb[0].mxu0
  %575 = vmatprep.mubr.f32.mxu0 0.0
  %576 = vmatmul.mubr.f32.gmra.mrb[0].mxu0 %v230
  %v577 = vpop.f32.mrb[0].mxu0
  %v578 = vadd.f32 %v91, %v577
  %v579 = vpop.f32.mrb[0].mxu0
  %580 = vmatprep.mubr.f32.mxu0 0.0
  %581 = vmatmul.mubr.f32.gmra.mrb[0].mxu0 %v233
  %v582 = vpop.f32.mrb[0].mxu0
  %v583 = vadd.f32 %v91, %v582
  %v584 = vpop.f32.mrb[0].mxu0
  %585 = vmatprep.mubr.f32.mxu0 0.0
  %586 = vmatmul.mubr.f32.gmra.mrb[0].mxu0 %v236
  %v587 = vpop.f32.mrb[0].mxu0
  %v588 = vadd.f32 %v91, %v587
  %v589 = vpop.f32.mrb[0].mxu0
  %590 = vmatprep.mubr.f32.mxu0 0.0
  %591 = vmatmul.mubr.f32.gmra.mrb[0].mxu0 %v239
  %v592 = vpop.f32.mrb[0].mxu0
  %v593 = vadd.f32 %v91, %v592
  %v594 = vpop.f32.mrb[0].mxu0
  %595 = vmatprep.mubr.f32.mxu0 0.0
  %596 = vmatmul.mubr.f32.gmra.mrb[0].mxu0 %v242
  %v597 = vpop.f32.mrb[0].mxu0
  %v598 = vadd.f32 %v91, %v597
  %v599 = vpop.f32.mrb[0].mxu0
  %600 = vmatprep.mubr.f32.mxu0 0.0
  %601 = vmatmul.mubr.f32.gmra.mrb[0].mxu0 %v245
  %v602 = vpop.f32.mrb[0].mxu0
  %v603 = vadd.f32 %v91, %v602
  %v604 = vpop.f32.mrb[0].mxu0
  %605 = vmatprep.mubr.f32.mxu0 0.0
  %606 = vmatmul.mubr.f32.gmra.mrb[0].mxu0 %v248
  %v607 = vpop.f32.mrb[0].mxu0
  %v608 = vadd.f32 %v91, %v607
  %v609 = vpop.f32.mrb[0].mxu0
  %610 = vmatprep.mubr.f32.mxu0 0.0
  %611 = vmatmul.mubr.f32.gmra.mrb[0].mxu0 %v251
  %v612 = vpop.f32.mrb[0].mxu0
  %v613 = vadd.f32 %v91, %v612
  %v614 = vpop.f32.mrb[0].mxu0
  %615 = vmatprep.mubr.f32.mxu0 0.0
  %616 = vmatmul.mubr.f32.gmra.mrb[0].mxu0 %v254
  %v617 = vpop.f32.mrb[0].mxu0
  %v618 = vadd.f32 %v91, %v617
  %v619 = vpop.f32.mrb[0].mxu0
  %620 = vmatprep.mubr.f32.mxu0 0.0
  %621 = vmatmul.mubr.f32.gmra.mrb[0].mxu0 %v257
  %v622 = vpop.f32.mrb[0].mxu0
  %v623 = vadd.f32 %v91, %v622
  %v624 = vpop.f32.mrb[0].mxu0
  %625 = vmatprep.mubr.f32.mxu0 0.0
  %626 = vmatmul.mubr.f32.gmra.mrb[0].mxu0 %v260
  %v627 = vpop.f32.mrb[0].mxu0
  %v628 = vadd.f32 %v91, %v627
  %v629 = vpop.f32.mrb[0].mxu0
  %630 = vmatprep.mubr.f32.mxu0 0.0
  %631 = vmatmul.mubr.f32.gmra.mrb[0].mxu0 %v263
  %v632 = vpop.f32.mrb[0].mxu0
  %v633 = vadd.f32 %v91, %v632
  %v634 = vpop.f32.mrb[0].mxu0
  %635 = vmatprep.mubr.f32.mxu0 0.0
  %636 = vmatmul.mubr.f32.gmra.mrb[0].mxu0 %v266
  %v637 = vpop.f32.mrb[0].mxu0
  %v638 = vadd.f32 %v91, %v637
  %v639 = vpop.f32.mrb[0].mxu0
  %640 = vmatprep.mubr.f32.mxu0 0.0
  %641 = vmatmul.mubr.f32.gmra.mrb[0].mxu0 %v269
  %v642 = vpop.f32.mrb[0].mxu0
  %v643 = vadd.f32 %v91, %v642
  %v644 = vpop.f32.mrb[0].mxu0
  %645 = vmatprep.mubr.f32.mxu0 0.0
  %646 = vmatmul.mubr.f32.gmra.mrb[0].mxu0 %v272
  %v647 = vpop.f32.mrb[0].mxu0
  %v648 = vadd.f32 %v91, %v647
  %v649 = vpop.f32.mrb[0].mxu0
  %650 = vmatprep.mubr.f32.mxu0 0.0
  %651 = vmatmul.mubr.f32.gmra.mrb[0].mxu0 %v275
  %v652 = vpop.f32.mrb[0].mxu0
  %v653 = vadd.f32 %v91, %v652
  %v654 = vpop.f32.mrb[0].mxu0
  %655 = vmatprep.mubr.f32.mxu0 0.0
  %656 = vmatmul.mubr.f32.gmra.mrb[0].mxu0 %v278
  %v657 = vpop.f32.mrb[0].mxu0
  %v658 = vadd.f32 %v91, %v657
  %v659 = vpop.f32.mrb[0].mxu0
  %660 = vmatprep.mubr.f32.mxu0 0.0
  %661 = vmatmul.mubr.f32.gmra.mrb[0].mxu0 %v281
  %v662 = vpop.f32.mrb[0].mxu0
  %v663 = vadd.f32 %v91, %v662
  %v664 = vpop.f32.mrb[0].mxu0
  %665 = vmatprep.mubr.f32.mxu0 0.0
  %666 = vmatmul.mubr.f32.gmra.mrb[0].mxu0 %v284
  %v667 = vpop.f32.mrb[0].mxu0
  %v668 = vadd.f32 %v91, %v667
  %v669 = vpop.f32.mrb[0].mxu0
  %670 = vdwg.mxu0
  %v671 = vmax.f32 %v353, 0.0
  %v672 = vmax.f32 %v358, 0.0
  %v673 = vmax.f32 %v363, 0.0
  %v674 = vmax.f32 %v368, 0.0
  %v675 = vmax.f32 %v373, 0.0
  %v676 = vmax.f32 %v378, 0.0
  %v677 = vmax.f32 %v383, 0.0
  %v678 = vmax.f32 %v388, 0.0
  %v679 = vmax.f32 %v393, 0.0
  %v680 = vmax.f32 %v398, 0.0
  %v681 = vmax.f32 %v403, 0.0
  %v682 = vmax.f32 %v408, 0.0
  %v683 = vmax.f32 %v413, 0.0
  %v684 = vmax.f32 %v418, 0.0
  %v685 = vmax.f32 %v423, 0.0
  %v686 = vmax.f32 %v428, 0.0
  %v687 = vmax.f32 %v433, 0.0
  %v688 = vmax.f32 %v438, 0.0
  %v689 = vmax.f32 %v443, 0.0
  %v690 = vmax.f32 %v448, 0.0
  %v691 = vmax.f32 %v453, 0.0
  %v692 = vmax.f32 %v458, 0.0
  %v693 = vmax.f32 %v463, 0.0
  %v694 = vmax.f32 %v468, 0.0
  %v695 = vmax.f32 %v473, 0.0
  %v696 = vmax.f32 %v478, 0.0
  %v697 = vmax.f32 %v483, 0.0
  %v698 = vmax.f32 %v488, 0.0
  %v699 = vmax.f32 %v493, 0.0
  %v700 = vmax.f32 %v498, 0.0
  %v701 = vmax.f32 %v503, 0.0
  %v702 = vmax.f32 %v508, 0.0
  %v703 = vmax.f32 %v513, 0.0
  %v704 = vmax.f32 %v518, 0.0
  %v705 = vmax.f32 %v523, 0.0
  %v706 = vmax.f32 %v528, 0.0
  %v707 = vmax.f32 %v533, 0.0
  %v708 = vmax.f32 %v538, 0.0
  %v709 = vmax.f32 %v543, 0.0
  %v710 = vmax.f32 %v548, 0.0
  %v711 = vmax.f32 %v553, 0.0
  %v712 = vmax.f32 %v558, 0.0
  %v713 = vmax.f32 %v563, 0.0
  %v714 = vmax.f32 %v568, 0.0
  %v715 = vmax.f32 %v573, 0.0
  %v716 = vmax.f32 %v578, 0.0
  %v717 = vmax.f32 %v583, 0.0
  %v718 = vmax.f32 %v588, 0.0
  %v719 = vmax.f32 %v593, 0.0
  %v720 = vmax.f32 %v598, 0.0
  %v721 = vmax.f32 %v603, 0.0
  %v722 = vmax.f32 %v608, 0.0
  %v723 = vmax.f32 %v613, 0.0
  %v724 = vmax.f32 %v618, 0.0
  %v725 = vmax.f32 %v623, 0.0
  %v726 = vmax.f32 %v628, 0.0
  %v727 = vmax.f32 %v633, 0.0
  %v728 = vmax.f32 %v638, 0.0
  %v729 = vmax.f32 %v643, 0.0
  %v730 = vmax.f32 %v648, 0.0
  %v731 = vmax.f32 %v653, 0.0
  %v732 = vmax.f32 %v658, 0.0
  %v733 = vmax.f32 %v663, 0.0
  %v734 = vmax.f32 %v668, 0.0
  %vm735 = vcmask 261120
  %736 = vst.msk [vmem:[%s3] sm:$0xff] %vm735, %v671
  %737 = vst.msk [vmem:[%s3 + $0x8] sm:$0xff] %vm735, %v672
  %738 = vst.msk [vmem:[%s3 + $0x10] sm:$0xff] %vm735, %v673
  %739 = vst.msk [vmem:[%s3 + $0x18] sm:$0xff] %vm735, %v674
  %740 = vst.msk [vmem:[%s3 + $0x20] sm:$0xff] %vm735, %v675
  %741 = vst.msk [vmem:[%s3 + $0x28] sm:$0xff] %vm735, %v676
  %742 = vst.msk [vmem:[%s3 + $0x30] sm:$0xff] %vm735, %v677
  %743 = vst.msk [vmem:[%s3 + $0x38] sm:$0xff] %vm735, %v678
  %744 = vst.msk [vmem:[%s3 + $0x40] sm:$0xff] %vm735, %v679
  %745 = vst.msk [vmem:[%s3 + $0x48] sm:$0xff] %vm735, %v680
  %746 = vst.msk [vmem:[%s3 + $0x50] sm:$0xff] %vm735, %v681
  %747 = vst.msk [vmem:[%s3 + $0x58] sm:$0xff] %vm735, %v682
  %748 = vst.msk [vmem:[%s3 + $0x60] sm:$0xff] %vm735, %v683
  %749 = vst.msk [vmem:[%s3 + $0x68] sm:$0xff] %vm735, %v684
  %750 = vst.msk [vmem:[%s3 + $0x70] sm:$0xff] %vm735, %v685
  %751 = vst.msk [vmem:[%s3 + $0x78] sm:$0xff] %vm735, %v686
  %752 = vst.msk [vmem:[%s3 + $0x80] sm:$0xff] %vm735, %v687
  %753 = vst.msk [vmem:[%s3 + $0x88] sm:$0xff] %vm735, %v688
  %754 = vst.msk [vmem:[%s3 + $0x90] sm:$0xff] %vm735, %v689
  %755 = vst.msk [vmem:[%s3 + $0x98] sm:$0xff] %vm735, %v690
  %756 = vst.msk [vmem:[%s3 + $0xa0] sm:$0xff] %vm735, %v691
  %757 = vst.msk [vmem:[%s3 + $0xa8] sm:$0xff] %vm735, %v692
  %758 = vst.msk [vmem:[%s3 + $0xb0] sm:$0xff] %vm735, %v693
  %759 = vst.msk [vmem:[%s3 + $0xb8] sm:$0xff] %vm735, %v694
  %760 = vst.msk [vmem:[%s3 + $0xc0] sm:$0xff] %vm735, %v695
  %761 = vst.msk [vmem:[%s3 + $0xc8] sm:$0xff] %vm735, %v696
  %762 = vst.msk [vmem:[%s3 + $0xd0] sm:$0xff] %vm735, %v697
  %763 = vst.msk [vmem:[%s3 + $0xd8] sm:$0xff] %vm735, %v698
  %764 = vst.msk [vmem:[%s3 + $0xe0] sm:$0xff] %vm735, %v699
  %765 = vst.msk [vmem:[%s3 + $0xe8] sm:$0xff] %vm735, %v700
  %766 = vst.msk [vmem:[%s3 + $0xf0] sm:$0xff] %vm735, %v701
  %767 = vst.msk [vmem:[%s3 + $0xf8] sm:$0xff] %vm735, %v702
  %768 = vst.msk [vmem:[%s3 + $0x100] sm:$0xff] %vm735, %v703
  %769 = vst.msk [vmem:[%s3 + $0x108] sm:$0xff] %vm735, %v704
  %770 = vst.msk [vmem:[%s3 + $0x110] sm:$0xff] %vm735, %v705
  %771 = vst.msk [vmem:[%s3 + $0x118] sm:$0xff] %vm735, %v706
  %772 = vst.msk [vmem:[%s3 + $0x120] sm:$0xff] %vm735, %v707
  %773 = vst.msk [vmem:[%s3 + $0x128] sm:$0xff] %vm735, %v708
  %774 = vst.msk [vmem:[%s3 + $0x130] sm:$0xff] %vm735, %v709
  %775 = vst.msk [vmem:[%s3 + $0x138] sm:$0xff] %vm735, %v710
  %776 = vst.msk [vmem:[%s3 + $0x140] sm:$0xff] %vm735, %v711
  %777 = vst.msk [vmem:[%s3 + $0x148] sm:$0xff] %vm735, %v712
  %778 = vst.msk [vmem:[%s3 + $0x150] sm:$0xff] %vm735, %v713
  %779 = vst.msk [vmem:[%s3 + $0x158] sm:$0xff] %vm735, %v714
  %780 = vst.msk [vmem:[%s3 + $0x160] sm:$0xff] %vm735, %v715
  %781 = vst.msk [vmem:[%s3 + $0x168] sm:$0xff] %vm735, %v716
  %782 = vst.msk [vmem:[%s3 + $0x170] sm:$0xff] %vm735, %v717
  %783 = vst.msk [vmem:[%s3 + $0x178] sm:$0xff] %vm735, %v718
  %784 = vst.msk [vmem:[%s3 + $0x180] sm:$0xff] %vm735, %v719
  %785 = vst.msk [vmem:[%s3 + $0x188] sm:$0xff] %vm735, %v720
  %786 = vst.msk [vmem:[%s3 + $0x190] sm:$0xff] %vm735, %v721
  %787 = vst.msk [vmem:[%s3 + $0x198] sm:$0xff] %vm735, %v722
  %788 = vst.msk [vmem:[%s3 + $0x1a0] sm:$0xff] %vm735, %v723
  %789 = vst.msk [vmem:[%s3 + $0x1a8] sm:$0xff] %vm735, %v724
  %790 = vst.msk [vmem:[%s3 + $0x1b0] sm:$0xff] %vm735, %v725
  %791 = vst.msk [vmem:[%s3 + $0x1b8] sm:$0xff] %vm735, %v726
  %792 = vst.msk [vmem:[%s3 + $0x1c0] sm:$0xff] %vm735, %v727
  %793 = vst.msk [vmem:[%s3 + $0x1c8] sm:$0xff] %vm735, %v728
  %794 = vst.msk [vmem:[%s3 + $0x1d0] sm:$0xff] %vm735, %v729
  %795 = vst.msk [vmem:[%s3 + $0x1d8] sm:$0xff] %vm735, %v730
  %796 = vst.msk [vmem:[%s3 + $0x1e0] sm:$0xff] %vm735, %v731
  %797 = vst.msk [vmem:[%s3 + $0x1e8] sm:$0xff] %vm735, %v732
  %798 = vst.msk [vmem:[%s3 + $0x1f0] sm:$0xff] %vm735, %v733
  %799 = vst.msk [vmem:[%s3 + $0x1f8] sm:$0xff] %vm735, %v734
  // Predicated region
  $region14: #{tpu_custom_call.1} parent=0 // pred_check
    _
  $region15: #{tpu_custom_call.1} parent=0 // pred_check_branch
    %801 = sbr.rel (0) target = $region17
  $region16: #{tpu_custom_call.1} parent=0 // pred_region
    _
  $region17: #{tpu_custom_call.1} parent=0 // pred_fallthru
    _
  // Predicated region
  $region18: #{tpu_custom_call.1} parent=0 // pred_check
    _
  $region19: #{tpu_custom_call.1} parent=0 // pred_check_branch
    %803 = sbr.rel (0) target = $region21
  $region20: #{tpu_custom_call.1} parent=0 // pred_region
    _
  $region21: #{tpu_custom_call.1} parent=0 // pred_fallthru
    _

</llo_original>
